<compile_context>
chip_gen: v6e
topology: v6e:2x2x1
jax: 0.10.0
libtpu: 0.0.40
codegen_flags: <defaults>
</compile_context>

<pallas_src>
import functools
import math

import jax
import jax.numpy as jnp
from jax.experimental import pallas as pl
from jax.experimental.pallas import tpu as pltpu


def _round_up(x, m):
    return ((x + m - 1) // m) * m


def _sdpa_kernel(q_ref, k_ref, v_ref, m_ref, ctx_ref, attn_ref, *,
                 inv_scale, attn_same_dtype_as_v):
    # Blocks: q (1,hb,TQ,Dk), k (1,hb,Lk,Dk), v (1,hb,Lk,Dv),
    #         m (1,mh,TQ,Lk) int8, ctx (1,hb,TQ,Dv), attn (1,hb,TQ,Lk).
    q = q_ref[0]                         # (hb, TQ, Dk)  native dtype
    k = k_ref[0]                         # (hb, Lk, Dk)
    v = v_ref[0]                         # (hb, Lk, Dv)
    m = m_ref[0]                         # (mh, TQ, Lk) int8; nonzero == masked

    # Fold 1/sqrt(d_k) into Q (TQ*Dk multiplies instead of TQ*Lk).
    q = q * jnp.asarray(inv_scale, dtype=q.dtype)

    # scores = (Q / sqrt(d_k)) @ K^T — contract last dims (no K^T copy),
    # MXU fed in native dtype, f32 accumulation.
    scores = jnp.einsum("hqd,hkd->hqk", q, k,
                        preferred_element_type=jnp.float32)   # (hb,TQ,Lk) f32

    # masked_fill_(attn_mask, -1e9); int8 compared directly (no int32 temp).
    scores = jnp.where(m != 0, jnp.float32(-1e9), scores)

    # Numerically-stable softmax over keys. Exact division (the approximate
    # EUP reciprocal was dropped — it broke the 2e-3 accuracy check).
    s_max = jnp.max(scores, axis=-1, keepdims=True)
    exps = jnp.exp(scores - s_max)
    denom = jnp.sum(exps, axis=-1, keepdims=True)
    attn = exps / denom                                       # (hb,TQ,Lk) f32

    # Cast the probabilities once; reuse for the PV matmul and the attn store.
    p = attn.astype(v.dtype)
    ctx = jnp.einsum("hqk,hkd->hqd", p, v,
                     preferred_element_type=jnp.float32)       # (hb,TQ,Dv) f32

    ctx_ref[0] = ctx.astype(ctx_ref.dtype)
    if attn_same_dtype_as_v:
        attn_ref[0] = p
    else:
        attn_ref[0] = attn.astype(attn_ref.dtype)


def scaled_dot_product_attention(Q, K, V, attn_mask, d_k, attn_dtype=None):
    """Q [B,H,Lq,Dk], K [B,H,Lk,Dk], V [B,H,Lk,Dv],
    attn_mask broadcastable to [B,H,Lq,Lk] with True/nonzero == masked.
    Returns (context, attn).  Pass attn_dtype=jnp.bfloat16 to halve the attn
    writeback on v5e/v6e (default matches the PyTorch module: Q.dtype)."""
    B, H, Lq, Dk = Q.shape
    Lk = K.shape[2]
    Dv = V.shape[3]
    if attn_dtype is None:
        attn_dtype = Q.dtype
    inv_scale = 1.0 / math.sqrt(float(d_k))

    itemsize = jnp.dtype(Q.dtype).itemsize
    attn_itemsize = jnp.dtype(attn_dtype).itemsize

    # Mask: keep broadcast (size-1) batch/head axes — no broadcast_to blow-up.
    if attn_mask.ndim != 4:
        attn_mask = jnp.reshape(
            attn_mask, (1,) * (4 - attn_mask.ndim) + attn_mask.shape)
    mb_full = attn_mask.shape[0] == B
    mh_full = attn_mask.shape[1] == H
    assert attn_mask.shape[2] == Lq and attn_mask.shape[3] == Lk, \
        "attn_mask query/key axes must be full-sized"
    mask8 = attn_mask.astype(jnp.int8)            # 1 byte / score HBM stream

    # --- VMEM budget (per-chip) ---------------------------------------------
    try:
        vmem_cap = int(pltpu.get_tpu_info().vmem_capacity_bytes)
    except Exception:
        vmem_cap = 64 << 20          # v7x per-TensorCore size: safe lower bound
    budget = int(0.60 * vmem_cap)

    def step_bytes(tq_, hb):
        q_b = hb * tq_ * Dk * itemsize
        k_b = hb * Lk * Dk * itemsize
        v_b = hb * Lk * Dv * itemsize
        m_b = (hb if mh_full else 1) * tq_ * Lk               # int8
        c_b = hb * tq_ * Dv * itemsize
        a_b = hb * tq_ * Lk * attn_itemsize
        # x2 double-buffered pipelined operands + f32 score/exp/attn temps.
        return 2 * (q_b + k_b + v_b + m_b + c_b + a_b) + 4 * hb * tq_ * Lk * 4

    # --- query tile -----------------------------------------------------------
    # Cap at 256 (matches the 256-wide MXU on v6e/v7x; bigger only grows f32
    # temporaries); rows aligned to the dtype's sublane packing.
    row_align = 16 if itemsize < 4 else 8
    tq = min(256, _round_up(Lq, row_align))
    tq = _round_up(tq, row_align)
    while tq > row_align and step_bytes(tq, 1) > budget:
        tq = _round_up(max(row_align, tq // 2), row_align)
    lq_p = _round_up(Lq, tq)
    n_q = lq_p // tq

    # Decode-style small Lq: process every head per grid step to amortize the
    # fixed per-step overhead and fill more MXU rows.
    h_blk = 1
    if Lq <= 32 and H > 1 and step_bytes(tq, H) <= budget:
        h_blk = H
    mh_blk = h_blk if mh_full else 1

    # --- pad only the query axis (if Lq is not a tile multiple) --------------
    if lq_p != Lq:
        Qp = jnp.pad(Q, [(0, 0), (0, 0), (0, lq_p - Lq), (0, 0)])
        mask8 = jnp.pad(mask8, [(0, 0), (0, 0), (0, lq_p - Lq), (0, 0)])
    else:
        Qp = Q

    # --- BlockSpecs -----------------------------------------------------------
    kv_kwargs = {}
    if n_q > 1:
        # K/V block index is constant across the qi axis: double-buffering them
        # only costs VMEM with no overlap benefit.
        kv_kwargs = dict(pipeline_mode=pl.Buffered(1))

    q_spec = pl.BlockSpec((1, h_blk, tq, Dk), lambda b, h, qi: (b, h, qi, 0))
    k_spec = pl.BlockSpec((1, h_blk, Lk, Dk), lambda b, h, qi: (b, h, 0, 0),
                          **kv_kwargs)
    v_spec = pl.BlockSpec((1, h_blk, Lk, Dv), lambda b, h, qi: (b, h, 0, 0),
                          **kv_kwargs)
    m_spec = pl.BlockSpec(
        (1, mh_blk, tq, Lk),
        lambda b, h, qi, _mb=mb_full, _mh=mh_full:
            (b if _mb else 0, h if _mh else 0, qi, 0))
    ctx_spec = pl.BlockSpec((1, h_blk, tq, Dv), lambda b, h, qi: (b, h, qi, 0))
    attn_spec = pl.BlockSpec((1, h_blk, tq, Lk), lambda b, h, qi: (b, h, qi, 0))

    vmem_limit = int(min(int(0.85 * vmem_cap),
                         max(32 << 20, step_bytes(tq, h_blk) + (8 << 20))))

    # Advisory cost estimate (K/V counted once per (b,h); exact mask/attn bytes).
    flops = 2 * B * H * lq_p * Lk * (Dk + Dv)
    bytes_accessed = (B * H * lq_p * Dk * itemsize       # Q read
                      + B * H * Lk * Dk * itemsize       # K read
                      + B * H * Lk * Dv * itemsize       # V read
                      + mask8.size                       # int8 mask read
                      + B * H * lq_p * Dv * itemsize     # ctx write
                      + B * H * lq_p * Lk * attn_itemsize)  # attn write
    cost = pl.CostEstimate(flops=int(flops),
                           transcendentals=int(B * H * lq_p * Lk),
                           bytes_accessed=int(bytes_accessed))

    kernel = functools.partial(
        _sdpa_kernel, inv_scale=inv_scale,
        attn_same_dtype_as_v=(jnp.dtype(attn_dtype) == jnp.dtype(V.dtype)))

    ctx_p, attn_p = pl.pallas_call(
        kernel,
        out_shape=(
            jax.ShapeDtypeStruct((B, H, lq_p, Dv), Q.dtype),
            jax.ShapeDtypeStruct((B, H, lq_p, Lk), attn_dtype),
        ),
        grid_spec=pltpu.PrefetchScalarGridSpec(
            num_scalar_prefetch=0,
            grid=(B, H // h_blk, n_q),
            in_specs=[q_spec, k_spec, v_spec, m_spec],
            out_specs=[ctx_spec, attn_spec],
        ),
        compiler_params=pltpu.CompilerParams(
            dimension_semantics=("parallel", "parallel", "parallel"),
            vmem_limit_bytes=vmem_limit,
        ),
        cost_estimate=cost,
    )(Qp, K, V, mask8)

    if lq_p != Lq:
        ctx_p = ctx_p[:, :, :Lq, :]
        attn_p = attn_p[:, :, :Lq, :]
    return ctx_p, attn_p


def _reference(Q, K, V, attn_mask, d_k):
    scale = jnp.sqrt(jnp.float32(d_k))
    scores = jnp.einsum("bhqd,bhkd->bhqk", Q, K,
                        precision=jax.lax.Precision.HIGHEST) / scale
    scores = jnp.where(attn_mask, -1e9, scores)
    attn = jax.nn.softmax(scores, axis=-1)
    ctx = jnp.einsum("bhqk,bhkd->bhqd", attn, V,
                     precision=jax.lax.Precision.HIGHEST)
    return ctx, attn


if __name__ == "__main__":
    B, H, Lq, Lk, Dk, Dv = 2, 4, 8, 8, 32, 32

    key = jax.random.PRNGKey(0)
    kq, kk, kv, km = jax.random.split(key, 4)
    Q = jax.random.normal(kq, (B, H, Lq, Dk), dtype=jnp.float32)
    K = jax.random.normal(kk, (B, H, Lk, Dk), dtype=jnp.float32)
    V = jax.random.normal(kv, (B, H, Lk, Dv), dtype=jnp.float32)
    # Boolean attention mask: True == masked (same convention as masked_fill_).
    attn_mask = jax.random.bernoulli(km, p=0.25, shape=(B, H, Lq, Lk))

    ctx, attn = scaled_dot_product_attention(Q, K, V, attn_mask, d_k=Dk)
    jax.block_until_ready((ctx, attn))

    ctx_ref, attn_ref = _reference(Q, K, V, attn_mask, d_k=Dk)
    assert jnp.allclose(ctx, ctx_ref, atol=2e-3, rtol=2e-3), (
        "ctx mismatch, max abs err = "
        f"{float(jnp.max(jnp.abs(ctx - ctx_ref)))}")
    assert jnp.allclose(attn, attn_ref, atol=2e-3, rtol=2e-3), (
        "attn mismatch, max abs err = "
        f"{float(jnp.max(jnp.abs(attn - attn_ref)))}")

    print("KERNEL_OK")
</pallas_src>

<mosaic_0001>
module attributes {stable_mosaic.version = 11 : i64} {
  func.func @_sdpa_kernel(%arg0: i32, %arg1: i32, %arg2: i32, %arg3: memref<1x4x8x32xf32, #tpu.memory_space<vmem>>, %arg4: memref<1x4x8x32xf32, #tpu.memory_space<vmem>>, %arg5: memref<1x4x8x32xf32, #tpu.memory_space<vmem>>, %arg6: memref<1x4x8x8xi8, #tpu.memory_space<vmem>>, %arg7: memref<1x4x8x32xf32, #tpu.memory_space<vmem>>, %arg8: memref<1x4x8x8xf32, #tpu.memory_space<vmem>>) attributes {dimension_semantics = [#tpu.dimension_semantics<parallel>, #tpu.dimension_semantics<parallel>, #tpu.dimension_semantics<parallel>], iteration_bounds = array<i64: 2, 1, 1>, scalar_prefetch = 0 : i64, scratch_operands = 0 : i64, tpu.core_type = #tpu.core_type<tc>, window_params = [{transform_indices = @transform_0, window_bounds = array<i64: 1, 4, 8, 32>}, {transform_indices = @transform_1, window_bounds = array<i64: 1, 4, 8, 32>}, {transform_indices = @transform_2, window_bounds = array<i64: 1, 4, 8, 32>}, {transform_indices = @transform_3, window_bounds = array<i64: 1, 4, 8, 8>}, {transform_indices = @transform_4, window_bounds = array<i64: 1, 4, 8, 32>}, {transform_indices = @transform_5, window_bounds = array<i64: 1, 4, 8, 8>}]} {
    %c0 = arith.constant 0 : index
    %c0_0 = arith.constant 0 : index
    %c0_1 = arith.constant 0 : index
    %c0_2 = arith.constant 0 : index
    %0 = vector.load %arg3[%c0, %c0_0, %c0_1, %c0_2] : memref<1x4x8x32xf32, #tpu.memory_space<vmem>>, vector<1x4x8x32xf32>
    %1 = vector.shape_cast %0 : vector<1x4x8x32xf32> to vector<4x8x32xf32>
    %c0_3 = arith.constant 0 : index
    %c0_4 = arith.constant 0 : index
    %c0_5 = arith.constant 0 : index
    %c0_6 = arith.constant 0 : index
    %2 = vector.load %arg4[%c0_3, %c0_4, %c0_5, %c0_6] : memref<1x4x8x32xf32, #tpu.memory_space<vmem>>, vector<1x4x8x32xf32>
    %3 = vector.shape_cast %2 : vector<1x4x8x32xf32> to vector<4x8x32xf32>
    %c0_7 = arith.constant 0 : index
    %c0_8 = arith.constant 0 : index
    %c0_9 = arith.constant 0 : index
    %c0_10 = arith.constant 0 : index
    %4 = vector.load %arg5[%c0_7, %c0_8, %c0_9, %c0_10] : memref<1x4x8x32xf32, #tpu.memory_space<vmem>>, vector<1x4x8x32xf32>
    %5 = vector.shape_cast %4 : vector<1x4x8x32xf32> to vector<4x8x32xf32>
    %c0_11 = arith.constant 0 : index
    %c0_12 = arith.constant 0 : index
    %c0_13 = arith.constant 0 : index
    %c0_14 = arith.constant 0 : index
    %6 = vector.load %arg6[%c0_11, %c0_12, %c0_13, %c0_14] : memref<1x4x8x8xi8, #tpu.memory_space<vmem>>, vector<1x4x8x8xi8>
    %7 = vector.shape_cast %6 : vector<1x4x8x8xi8> to vector<4x8x8xi8>
    %cst = arith.constant 0.176776692 : f32
    %8 = vector.broadcast %cst : f32 to vector<4x8x32xf32>
    %9 = arith.mulf %1, %8 : vector<4x8x32xf32>
    "tpu.trace_start"() <{level = 10 : i32, message = "hqd,hkd->hqk"}> : () -> ()
    %cst_15 = arith.constant dense<0.000000e+00> : vector<4x8x8xf32>
    %10 = tpu.matmul %9, %3, %cst_15 {dimension_numbers = #tpu.dot_dimension_numbers<[2], [2], [1], [1], [0, 0, 0, 1, 1, 1], [0], [0]>} : vector<4x8x32xf32>, vector<4x8x32xf32>, vector<4x8x8xf32> -> vector<4x8x8xf32>
    %c0_i8 = arith.constant 0 : i8
    "tpu.trace_stop"() : () -> ()
    %11 = vector.broadcast %c0_i8 : i8 to vector<4x8x8xi8>
    %12 = arith.cmpi ne, %7, %11 : vector<4x8x8xi8>
    %cst_16 = arith.constant -1.000000e+09 : f32
    %13 = vector.broadcast %cst_16 : f32 to vector<4x8x8xf32>
    %14 = arith.select %12, %13, %10 : vector<4x8x8xi1>, vector<4x8x8xf32>
    %cst_17 = arith.constant dense<0xFF800000> : vector<4x8xf32>
    %15 = vector.multi_reduction <maximumf>, %14, %cst_17 [2] : vector<4x8x8xf32> to vector<4x8xf32>
    %16 = vector.shape_cast %15 : vector<4x8xf32> to vector<4x8x1xf32>
    %17 = vector.broadcast %16 : vector<4x8x1xf32> to vector<4x8x8xf32>
    %18 = arith.subf %14, %17 : vector<4x8x8xf32>
    %19 = math.exp %18 : vector<4x8x8xf32>
    %cst_18 = arith.constant dense<0.000000e+00> : vector<4x8xf32>
    %20 = vector.multi_reduction <add>, %19, %cst_18 [2] : vector<4x8x8xf32> to vector<4x8xf32>
    %21 = vector.shape_cast %20 : vector<4x8xf32> to vector<4x8x1xf32>
    %22 = vector.broadcast %21 : vector<4x8x1xf32> to vector<4x8x8xf32>
    %23 = arith.divf %19, %22 : vector<4x8x8xf32>
    "tpu.trace_start"() <{level = 10 : i32, message = "hqk,hkd->hqd"}> : () -> ()
    %cst_19 = arith.constant dense<0.000000e+00> : vector<4x8x32xf32>
    %24 = tpu.matmul %23, %5, %cst_19 {dimension_numbers = #tpu.dot_dimension_numbers<[2], [1], [1], [2], [0, 0, 0, 1, 1, 2], [0], [0]>} : vector<4x8x8xf32>, vector<4x8x32xf32>, vector<4x8x32xf32> -> vector<4x8x32xf32>
    "tpu.trace_stop"() : () -> ()
    %c0_20 = arith.constant 0 : index
    %c0_21 = arith.constant 0 : index
    %c0_22 = arith.constant 0 : index
    %c0_23 = arith.constant 0 : index
    %25 = vector.load %arg7[%c0_20, %c0_21, %c0_22, %c0_23] : memref<1x4x8x32xf32, #tpu.memory_space<vmem>>, vector<1x4x8x32xf32>
    %26 = vector.shape_cast %25 : vector<1x4x8x32xf32> to vector<4x8x32xf32>
    %27 = vector.shape_cast %24 : vector<4x8x32xf32> to vector<1x4x8x32xf32>
    tpu.vector_store %arg7[%c0_20, %c0_21, %c0_22, %c0_23], %27 {strides = array<i32>} : memref<1x4x8x32xf32, #tpu.memory_space<vmem>>, vector<1x4x8x32xf32>,
    %c0_24 = arith.constant 0 : index
    %c0_25 = arith.constant 0 : index
    %c0_26 = arith.constant 0 : index
    %c0_27 = arith.constant 0 : index
    %28 = vector.load %arg8[%c0_24, %c0_25, %c0_26, %c0_27] : memref<1x4x8x8xf32, #tpu.memory_space<vmem>>, vector<1x4x8x8xf32>
    %29 = vector.shape_cast %28 : vector<1x4x8x8xf32> to vector<4x8x8xf32>
    %30 = vector.shape_cast %23 : vector<4x8x8xf32> to vector<1x4x8x8xf32>
    tpu.vector_store %arg8[%c0_24, %c0_25, %c0_26, %c0_27], %30 {strides = array<i32>} : memref<1x4x8x8xf32, #tpu.memory_space<vmem>>, vector<1x4x8x8xf32>,
    return
  }
  func.func @transform_0(%arg0: i32, %arg1: i32, %arg2: i32) -> (i32, i32, i32, i32) {
    %c0_i32 = arith.constant 0 : i32
    %c0_i32_0 = arith.constant 0 : i32
    return %arg0, %arg1, %arg2, %c0_i32 : i32, i32, i32, i32
  }
  func.func @transform_1(%arg0: i32, %arg1: i32, %arg2: i32) -> (i32, i32, i32, i32) {
    %c0_i32 = arith.constant 0 : i32
    %c0_i32_0 = arith.constant 0 : i32
    %c0_i32_1 = arith.constant 0 : i32
    return %arg0, %arg1, %c0_i32, %c0_i32_0 : i32, i32, i32, i32
  }
  func.func @transform_2(%arg0: i32, %arg1: i32, %arg2: i32) -> (i32, i32, i32, i32) {
    %c0_i32 = arith.constant 0 : i32
    %c0_i32_0 = arith.constant 0 : i32
    %c0_i32_1 = arith.constant 0 : i32
    return %arg0, %arg1, %c0_i32, %c0_i32_0 : i32, i32, i32, i32
  }
  func.func @transform_3(%arg0: i32, %arg1: i32, %arg2: i32) -> (i32, i32, i32, i32) {
    %c0_i32 = arith.constant 0 : i32
    %c0_i32_0 = arith.constant 0 : i32
    return %arg0, %arg1, %arg2, %c0_i32 : i32, i32, i32, i32
  }
  func.func @transform_4(%arg0: i32, %arg1: i32, %arg2: i32) -> (i32, i32, i32, i32) {
    %c0_i32 = arith.constant 0 : i32
    %c0_i32_0 = arith.constant 0 : i32
    return %arg0, %arg1, %arg2, %c0_i32 : i32, i32, i32, i32
  }
  func.func @transform_5(%arg0: i32, %arg1: i32, %arg2: i32) -> (i32, i32, i32, i32) {
    %c0_i32 = arith.constant 0 : i32
    %c0_i32_0 = arith.constant 0 : i32
    return %arg0, %arg1, %arg2, %c0_i32 : i32, i32, i32, i32
  }
}

</mosaic_0001>

<llo_original>
// kernel: tpu_custom_call.1
$region0: #{tpu_custom_call.1}
  #allocation0 [shape = 'u32[]', space=smem, size = 0x4, offset = 0x4, fixed_abs, tag = 'smem constant byte address 0x4 - core index']
  #allocation1 [shape = 'u32[144,128]{1,0:T(1,128)}', space=vmem, size = 0x12000, scoped, tag = 'internal scratch']
  %s0 = inlined_call_operand.hbm [shape: f32[2,4,8,32], index: 0, kind: input, shape index: {}]
  %s1 = inlined_call_operand.hbm [shape: f32[2,4,8,32], index: 1, kind: input, shape index: {}]
  %s2 = inlined_call_operand.hbm [shape: f32[2,4,8,32], index: 2, kind: input, shape index: {}]
  %s3 = inlined_call_operand.hbm [shape: s8[2,4,8,8], index: 3, kind: input, shape index: {}]
  %s4 = inlined_call_operand.hbm [shape: f32[2,4,8,32], index: 4, kind: output, shape index: {0}]
  %s5 = inlined_call_operand.hbm [shape: f32[2,4,8,8], index: 5, kind: output, shape index: {1}]
  %6 = xla_tuple %s4, %s5
  %s7 = sld [smem:[#allocation0]]
  $region73: #{tpu_custom_call.1} parent=0
    _
  %s9 = ssub.s32 1, %s7
  %s10 = scalar_select 0, %s9, %s7
  $region1: #{tpu_custom_call.1} parent=0
    #allocation2 [shape = 'u8[32768]{0}', space=vmem, size = 0x8000, scoped, tag = 'input window, operand 0']
    #allocation3 [shape = 's32[2]{0}', space=sflag, size = 0x8, scoped, tag = 'scoped memory for tpu_custom_call.1']
    #allocation4 [shape = 's32[2]{0}', space=sflag, size = 0x8, scoped, tag = 'scoped memory for tpu_custom_call.1']
    #allocation5 [shape = 'u8[32768]{0}', space=vmem, size = 0x8000, scoped, tag = 'input window, operand 1']
    #allocation6 [shape = 's32[2]{0}', space=sflag, size = 0x8, scoped, tag = 'scoped memory for tpu_custom_call.1']
    #allocation7 [shape = 'u8[32768]{0}', space=vmem, size = 0x8000, scoped, tag = 'input window, operand 2']
    #allocation8 [shape = 'u8[8192]{0}', space=vmem, size = 0x2000, scoped, tag = 'input window, operand 3']
    #allocation9 [shape = 's32[2]{0}', space=sflag, size = 0x8, scoped, tag = 'scoped memory for tpu_custom_call.1']
    #allocation10 [shape = 'u8[32768]{0}', space=vmem, size = 0x8000, scoped, tag = 'output window, operand 0']
    #allocation11 [shape = 'u8[32768]{0}', space=vmem, size = 0x8000, scoped, tag = 'output window, operand 1']
    #allocation12 [shape = 's32[2]{0}', space=sflag, size = 0x8, scoped, tag = 'scoped memory for tpu_custom_call.1']
    %11 = vsyncpa [#allocation3], 0
    %s12 = scalar_lea.sflag [#allocation3], 1
    %13 = vsyncpa %s12, 0
    %14 = vsyncpa [#allocation6], 0
    %s15 = scalar_lea.sflag [#allocation6], 1
    %16 = vsyncpa %s15, 0
    %17 = vsyncpa [#allocation9], 0
    %s18 = scalar_lea.sflag [#allocation9], 1
    %19 = vsyncpa %s18, 0
    %20 = vsyncpa [#allocation4], 0
    %s21 = scalar_lea.sflag [#allocation4], 1
    %22 = vsyncpa %s21, 0
    %23 = vsyncpa [#allocation12], 0
    %s24 = scalar_lea.sflag [#allocation12], 1
    %25 = vsyncpa %s24, 0
    loop: start=0, step=1, limit=4
    $region2: #{tpu_custom_call.1} parent=1 // loop_pre_header
      _
    $region3: #{tpu_custom_call.1} parent=1 // loop_header
      %s27 = sphi 0, %s31
      %p28 = scmp.ge.s32.totalorder %s27, 4
      %s34 = sphi 0, %s53
      %s35 = sphi 0, %s49
      %s36 = sphi 0, %s45
      %s37 = sphi 0, %s34
      %s38 = sphi 0, %s35
      %s39 = sphi 0, %s36
      %s40 = sphi 0, %s37
      %s41 = sphi 0, %s38
      %s42 = sphi 0, %s39
      %s60 = sphi 0, %s62
      %s63 = sphi 0, %s60
      %s64 = sphi 0, %s63
      %s80 = sphi 0, %s64
      %s88 = sphi 0, %s90
      %s91 = sphi 0, %s88
      %s92 = sphi 0, %s91
      %s108 = sphi 0, %s92
      %s116 = sphi 0, %s118
      %s119 = sphi 0, %s116
      %s120 = sphi 0, %s119
      %s136 = sphi 0, %s120
      %s146 = sphi 0, %s148
      %s149 = sphi 0, %s146
      %s150 = sphi 0, %s149
      %s166 = sphi 0, %s150
      %s176 = sphi 0, %s178
      %s179 = sphi 0, %s176
      %s180 = sphi 0, %s179
      %s196 = sphi 0, %s180
      %s206 = sphi 0, %s208
      %s209 = sphi 0, %s206
      %s210 = sphi 0, %s209
      %s226 = sphi 0, %s210
    $region4: #{tpu_custom_call.1} parent=1 // loop_header_branch
      %30 = sbr.rel (%p28) target = $region8
    $region5: #{tpu_custom_call.1} parent=1 // loop_body
      %s32 = ssub.s32 %s27, 1
      %s33 = ssub.s32 %s27, 2
      %s43 = sadd.s32 1, %s36
      %p44 = scmp.ge.s32.totalorder %s43, 1
      %s45 = scalar_select %p44, 0, %s43
      %s46 = sadd.s32 1, %s35
      %s47 = scalar_select %p44, %s46, %s35
      %p48 = scmp.ge.s32.totalorder %s47, 1
      %s49 = scalar_select %p48, 0, %s47
      %s50 = sadd.s32 1, %s34
      %s51 = scalar_select %p48, %s50, %s34
      %p52 = scmp.ge.s32.totalorder %s51, 2
      %s53 = scalar_select %p52, 0, %s51
      %s54 = ssub.s32 %s34, %s53
      %s55 = ssub.s32 %s35, %s49
      %s56 = sor.u32 %s54, %s55
      %s57 = ssub.s32 %s36, %s45
      %s58 = sor.u32 %s56, %s57
      %p59 = scmp.eq.s32.totalorder %s58, 0
      %s61 = sadd.s32 %s60, 1
      %s62 = scalar_select %p59, %s60, %s61
      %p65 = pneg %p59
      %p66 = scmp.eq.s32.totalorder %s27, 1
      %p67 = por %p65, %p66
      %p68 = scmp.ne.s32.totalorder %s60, %s63
      %p69 = scmp.eq.s32.totalorder %s27, 0
      %p70 = por %p68, %p69
      %p71 = scmp.ne.s32.totalorder %s60, %s63
      %p72 = scmp.eq.s32.totalorder %s32, 1
      %p73 = por %p71, %p72
      %p74 = scmp.ne.s32.totalorder %s63, %s64
      %p75 = scmp.eq.s32.totalorder %s32, 0
      %p76 = por %p74, %p75
      %p77 = scmp.ne.s32.totalorder %s63, %s64
      %p78 = scmp.eq.s32.totalorder %s33, 1
      %p79 = por %p77, %p78
      %p81 = scmp.ne.s32.totalorder %s64, %s80
      %p82 = scmp.eq.s32.totalorder %s33, 0
      %p83 = por %p81, %p82
      %s84 = ssub.s32 %s34, %s53
      %s85 = ssub.s32 %s35, %s49
      %s86 = sor.u32 %s84, %s85
      %p87 = scmp.eq.s32.totalorder %s86, 0
      %s89 = sadd.s32 %s88, 1
      %s90 = scalar_select %p87, %s88, %s89
      %p93 = pneg %p87
      %p94 = scmp.eq.s32.totalorder %s27, 1
      %p95 = por %p93, %p94
      %p96 = scmp.ne.s32.totalorder %s88, %s91
      %p97 = scmp.eq.s32.totalorder %s27, 0
      %p98 = por %p96, %p97
      %p99 = scmp.ne.s32.totalorder %s88, %s91
      %p100 = scmp.eq.s32.totalorder %s32, 1
      %p101 = por %p99, %p100
      %p102 = scmp.ne.s32.totalorder %s91, %s92
      %p103 = scmp.eq.s32.totalorder %s32, 0
      %p104 = por %p102, %p103
      %p105 = scmp.ne.s32.totalorder %s91, %s92
      %p106 = scmp.eq.s32.totalorder %s33, 1
      %p107 = por %p105, %p106
      %p109 = scmp.ne.s32.totalorder %s92, %s108
      %p110 = scmp.eq.s32.totalorder %s33, 0
      %p111 = por %p109, %p110
      %s112 = ssub.s32 %s34, %s53
      %s113 = ssub.s32 %s35, %s49
      %s114 = sor.u32 %s112, %s113
      %p115 = scmp.eq.s32.totalorder %s114, 0
      %s117 = sadd.s32 %s116, 1
      %s118 = scalar_select %p115, %s116, %s117
      %p121 = pneg %p115
      %p122 = scmp.eq.s32.totalorder %s27, 1
      %p123 = por %p121, %p122
      %p124 = scmp.ne.s32.totalorder %s116, %s119
      %p125 = scmp.eq.s32.totalorder %s27, 0
      %p126 = por %p124, %p125
      %p127 = scmp.ne.s32.totalorder %s116, %s119
      %p128 = scmp.eq.s32.totalorder %s32, 1
      %p129 = por %p127, %p128
      %p130 = scmp.ne.s32.totalorder %s119, %s120
      %p131 = scmp.eq.s32.totalorder %s32, 0
      %p132 = por %p130, %p131
      %p133 = scmp.ne.s32.totalorder %s119, %s120
      %p134 = scmp.eq.s32.totalorder %s33, 1
      %p135 = por %p133, %p134
      %p137 = scmp.ne.s32.totalorder %s120, %s136
      %p138 = scmp.eq.s32.totalorder %s33, 0
      %p139 = por %p137, %p138
      %s140 = ssub.s32 %s34, %s53
      %s141 = ssub.s32 %s35, %s49
      %s142 = sor.u32 %s140, %s141
      %s143 = ssub.s32 %s36, %s45
      %s144 = sor.u32 %s142, %s143
      %p145 = scmp.eq.s32.totalorder %s144, 0
      %s147 = sadd.s32 %s146, 1
      %s148 = scalar_select %p145, %s146, %s147
      %p151 = pneg %p145
      %p152 = scmp.eq.s32.totalorder %s27, 1
      %p153 = por %p151, %p152
      %p154 = scmp.ne.s32.totalorder %s146, %s149
      %p155 = scmp.eq.s32.totalorder %s27, 0
      %p156 = por %p154, %p155
      %p157 = scmp.ne.s32.totalorder %s146, %s149
      %p158 = scmp.eq.s32.totalorder %s32, 1
      %p159 = por %p157, %p158
      %p160 = scmp.ne.s32.totalorder %s149, %s150
      %p161 = scmp.eq.s32.totalorder %s32, 0
      %p162 = por %p160, %p161
      %p163 = scmp.ne.s32.totalorder %s149, %s150
      %p164 = scmp.eq.s32.totalorder %s33, 1
      %p165 = por %p163, %p164
      %p167 = scmp.ne.s32.totalorder %s150, %s166
      %p168 = scmp.eq.s32.totalorder %s33, 0
      %p169 = por %p167, %p168
      %s170 = ssub.s32 %s34, %s53
      %s171 = ssub.s32 %s35, %s49
      %s172 = sor.u32 %s170, %s171
      %s173 = ssub.s32 %s36, %s45
      %s174 = sor.u32 %s172, %s173
      %p175 = scmp.eq.s32.totalorder %s174, 0
      %s177 = sadd.s32 %s176, 1
      %s178 = scalar_select %p175, %s176, %s177
      %p181 = pneg %p175
      %p182 = scmp.eq.s32.totalorder %s27, 1
      %p183 = por %p181, %p182
      %p184 = scmp.ne.s32.totalorder %s176, %s179
      %p185 = scmp.eq.s32.totalorder %s27, 0
      %p186 = por %p184, %p185
      %p187 = scmp.ne.s32.totalorder %s176, %s179
      %p188 = scmp.eq.s32.totalorder %s32, 1
      %p189 = por %p187, %p188
      %p190 = scmp.ne.s32.totalorder %s179, %s180
      %p191 = scmp.eq.s32.totalorder %s32, 0
      %p192 = por %p190, %p191
      %p193 = scmp.ne.s32.totalorder %s179, %s180
      %p194 = scmp.eq.s32.totalorder %s33, 1
      %p195 = por %p193, %p194
      %p197 = scmp.ne.s32.totalorder %s180, %s196
      %p198 = scmp.eq.s32.totalorder %s33, 0
      %p199 = por %p197, %p198
      %s200 = ssub.s32 %s34, %s53
      %s201 = ssub.s32 %s35, %s49
      %s202 = sor.u32 %s200, %s201
      %s203 = ssub.s32 %s36, %s45
      %s204 = sor.u32 %s202, %s203
      %p205 = scmp.eq.s32.totalorder %s204, 0
      %s207 = sadd.s32 %s206, 1
      %s208 = scalar_select %p205, %s206, %s207
      %p211 = pneg %p205
      %p212 = scmp.eq.s32.totalorder %s27, 1
      %p213 = por %p211, %p212
      %p214 = scmp.ne.s32.totalorder %s206, %s209
      %p215 = scmp.eq.s32.totalorder %s27, 0
      %p216 = por %p214, %p215
      %p217 = scmp.ne.s32.totalorder %s206, %s209
      %p218 = scmp.eq.s32.totalorder %s32, 1
      %p219 = por %p217, %p218
      %p220 = scmp.ne.s32.totalorder %s209, %s210
      %p221 = scmp.eq.s32.totalorder %s32, 0
      %p222 = por %p220, %p221
      %p223 = scmp.ne.s32.totalorder %s209, %s210
      %p224 = scmp.eq.s32.totalorder %s33, 1
      %p225 = por %p223, %p224
      %p227 = scmp.ne.s32.totalorder %s210, %s226
      %p228 = scmp.eq.s32.totalorder %s33, 0
      %p229 = por %p227, %p228
      %p230 = scmp.le.s32.totalorder 1, %s27
      %p231 = scmp.lt.s32.totalorder %s27, 3
      %p232 = pnand %p230, %p231
      %p233 = pneg %p232
      // Predicated region
      $region9: #{tpu_custom_call.1} parent=5 // pred_check
        _
      $region10: #{tpu_custom_call.1} parent=5 // pred_check_branch
        %235 = sbr.rel (%p232) target = $region12
      $region11: #{tpu_custom_call.1} parent=5 // pred_region
        %s236 = ssub.s32 %s27, 1
      $region12: #{tpu_custom_call.1} parent=5 // pred_fallthru
        _
      %p237 = scmp.lt.s32.totalorder %s27, 2
      // Predicated region
      $region13: #{tpu_custom_call.1} parent=5 // pred_check
        %p238 = pneg %p237
      $region14: #{tpu_custom_call.1} parent=5 // pred_check_branch
        %240 = sbr.rel (%p238) target = $region16
      $region15: #{tpu_custom_call.1} parent=5 // pred_region
        // Predicated region
        $region17: #{tpu_custom_call.1} parent=15 // pred_check
          %p241 = pneg %p70
        $region18: #{tpu_custom_call.1} parent=15 // pred_check_branch
          %243 = sbr.rel (%p241) target = $region20
        $region19: #{tpu_custom_call.1} parent=15 // pred_region
          %s244 = sand.u32 %s60, 1
          %s245 = scalar_lea.sflag [#allocation3], %s244
          %s246 = sand.u32 %s60, 1
          %s247 = smul.addr %s246, 32
          %s248 = scalar_lea.vmem [#allocation2], %s247
          %s249 = smul.u32 4, %s35
          %s251 = ssub.s32 512, 512
          %252 = vsyncadd %s245, %s251
          %s253 = sadd.s32 %s36, %s249
          %s254 = smul.addr %s34, 4
          %s255 = sadd.s32 %s253, %s254
          %s256 = smul.addr %s255, 128
          %s257 = scalar_lea.hbm %s0, %s256
          %s258 = sshll.u32 %s248, 4
          %s259 = int_to_ptr.vmem [resolvable:$true] %s258
          %264 = dma.hbm_to_vmem [thread:$0]  %s257, 512, %s259, %s245, 128, 128, 8
        $region20: #{tpu_custom_call.1} parent=15 // pred_fallthru
          _
        // Predicated region
        $region21: #{tpu_custom_call.1} parent=15 // pred_check
          %p265 = pneg %p98
        $region22: #{tpu_custom_call.1} parent=15 // pred_check_branch
          %267 = sbr.rel (%p265) target = $region24
        $region23: #{tpu_custom_call.1} parent=15 // pred_region
          %s268 = sand.u32 %s27, 1
          %s269 = scalar_lea.sflag [#allocation6], %s268
          %s270 = sand.u32 %s88, 1
          %s271 = smul.addr %s270, 32
          %s272 = scalar_lea.vmem [#allocation5], %s271
          %s273 = smul.u32 4, %s35
          %s275 = ssub.s32 512, 512
          %276 = vsyncadd %s269, %s275
          %s277 = smul.addr %s34, 4
          %s278 = sadd.s32 %s273, %s277
          %s279 = smul.addr %s278, 128
          %s280 = scalar_lea.hbm %s1, %s279
          %s281 = sshll.u32 %s272, 4
          %s282 = int_to_ptr.vmem [resolvable:$true] %s281
          %287 = dma.hbm_to_vmem [thread:$0]  %s280, 512, %s282, %s269, 128, 128, 8
        $region24: #{tpu_custom_call.1} parent=15 // pred_fallthru
          _
        // Predicated region
        $region25: #{tpu_custom_call.1} parent=15 // pred_check
          %p288 = pneg %p126
        $region26: #{tpu_custom_call.1} parent=15 // pred_check_branch
          %290 = sbr.rel (%p288) target = $region28
        $region27: #{tpu_custom_call.1} parent=15 // pred_region
          %s291 = sand.u32 %s27, 1
          %s292 = scalar_lea.sflag [#allocation6], %s291
          %s293 = sand.u32 %s116, 1
          %s294 = smul.addr %s293, 32
          %s295 = scalar_lea.vmem [#allocation7], %s294
          %s296 = smul.u32 4, %s35
          %s298 = ssub.s32 512, 512
          %299 = vsyncadd %s292, %s298
          %s300 = smul.addr %s34, 4
          %s301 = sadd.s32 %s296, %s300
          %s302 = smul.addr %s301, 128
          %s303 = scalar_lea.hbm %s2, %s302
          %s304 = sshll.u32 %s295, 4
          %s305 = int_to_ptr.vmem [resolvable:$true] %s304
          %310 = dma.hbm_to_vmem [thread:$0]  %s303, 512, %s305, %s292, 128, 128, 8
        $region28: #{tpu_custom_call.1} parent=15 // pred_fallthru
          _
        // Predicated region
        $region29: #{tpu_custom_call.1} parent=15 // pred_check
          %p311 = pneg %p156
        $region30: #{tpu_custom_call.1} parent=15 // pred_check_branch
          %313 = sbr.rel (%p311) target = $region32
        $region31: #{tpu_custom_call.1} parent=15 // pred_region
          %s314 = sand.u32 %s146, 1
          %s315 = scalar_lea.sflag [#allocation9], %s314
          %s316 = sand.u32 %s146, 1
          %s317 = smul.addr %s316, 8
          %s318 = scalar_lea.vmem [#allocation8], %s317
          %s319 = smul.u32 4, %s35
          %s321 = ssub.s32 128, 128
          %322 = vsyncadd %s315, %s321
          %s323 = sadd.s32 %s36, %s319
          %s324 = smul.addr %s34, 4
          %s325 = sadd.s32 %s323, %s324
          %s326 = smul.addr %s325, 32
          %s327 = scalar_lea.hbm %s3, %s326
          %s328 = sshll.u32 %s318, 4
          %s329 = int_to_ptr.vmem [resolvable:$true] %s328
          %334 = dma.hbm_to_vmem [thread:$0]  %s327, 128, %s329, %s315, 32, 32, 2
        $region32: #{tpu_custom_call.1} parent=15 // pred_fallthru
          _
      $region16: #{tpu_custom_call.1} parent=5 // pred_fallthru
        _
      %p335 = scmp.le.s32.totalorder 1, %s27
      %p336 = scmp.lt.s32.totalorder %s27, 3
      %p337 = pnand %p335, %p336
      %p338 = pneg %p337
      // Predicated region
      $region33: #{tpu_custom_call.1} parent=5 // pred_check
        _
      $region34: #{tpu_custom_call.1} parent=5 // pred_check_branch
        %340 = sbr.rel (%p337) target = $region36
      $region35: #{tpu_custom_call.1} parent=5 // pred_region
        %s341 = ssub.s32 %s27, 1
        %s342 = sand.u32 %s63, 1
        %s343 = scalar_lea.sflag [#allocation3], %s342
        %s344 = sand.u32 %s63, 1
        %s345 = smul.addr %s344, 32
        %s346 = scalar_lea.vmem [#allocation2], %s345
        // Predicated region
        $region37: #{tpu_custom_call.1} parent=35 // pred_check
          %p347 = pneg %p76
        $region38: #{tpu_custom_call.1} parent=35 // pred_check_branch
          %349 = sbr.rel (%p347) target = $region40
        $region39: #{tpu_custom_call.1} parent=35 // pred_region
          %350 = dma.done %s343, 512
        $region40: #{tpu_custom_call.1} parent=35 // pred_fallthru
          _
        %s351 = sand.u32 %s32, 1
        %s352 = scalar_lea.sflag [#allocation6], %s351
        %s353 = sand.u32 %s91, 1
        %s354 = smul.addr %s353, 32
        %s355 = scalar_lea.vmem [#allocation5], %s354
        // Predicated region
        $region41: #{tpu_custom_call.1} parent=35 // pred_check
          %p356 = pneg %p104
        $region42: #{tpu_custom_call.1} parent=35 // pred_check_branch
          %358 = sbr.rel (%p356) target = $region44
        $region43: #{tpu_custom_call.1} parent=35 // pred_region
          %359 = dma.done %s352, 512
        $region44: #{tpu_custom_call.1} parent=35 // pred_fallthru
          _
        %s360 = sand.u32 %s32, 1
        %s361 = scalar_lea.sflag [#allocation6], %s360
        %s362 = sand.u32 %s119, 1
        %s363 = smul.addr %s362, 32
        %s364 = scalar_lea.vmem [#allocation7], %s363
        // Predicated region
        $region45: #{tpu_custom_call.1} parent=35 // pred_check
          %p365 = pneg %p132
        $region46: #{tpu_custom_call.1} parent=35 // pred_check_branch
          %367 = sbr.rel (%p365) target = $region48
        $region47: #{tpu_custom_call.1} parent=35 // pred_region
          %368 = dma.done %s361, 512
        $region48: #{tpu_custom_call.1} parent=35 // pred_fallthru
          _
        %s369 = sand.u32 %s149, 1
        %s370 = scalar_lea.sflag [#allocation9], %s369
        %s371 = sand.u32 %s149, 1
        %s372 = smul.addr %s371, 8
        %s373 = scalar_lea.vmem [#allocation8], %s372
        // Predicated region
        $region49: #{tpu_custom_call.1} parent=35 // pred_check
          %p374 = pneg %p162
        $region50: #{tpu_custom_call.1} parent=35 // pred_check_branch
          %376 = sbr.rel (%p374) target = $region52
        $region51: #{tpu_custom_call.1} parent=35 // pred_region
          %377 = dma.done %s370, 128
        $region52: #{tpu_custom_call.1} parent=35 // pred_fallthru
          _
        %s378 = sand.u32 %s63, 1
        %s379 = scalar_lea.sflag [#allocation3], %s378
        %s380 = sand.u32 %s63, 1
        %s381 = smul.addr %s380, 32
        %s382 = scalar_lea.vmem [#allocation2], %s381
        %p383 = pneg %p76
        %p384 = pneg %p73
        %s385 = sand.u32 %s32, 1
        %s386 = scalar_lea.sflag [#allocation6], %s385
        %s387 = sand.u32 %s91, 1
        %s388 = smul.addr %s387, 32
        %s389 = scalar_lea.vmem [#allocation5], %s388
        %p390 = pneg %p104
        %p391 = pneg %p101
        %s392 = sand.u32 %s32, 1
        %s393 = scalar_lea.sflag [#allocation6], %s392
        %s394 = sand.u32 %s119, 1
        %s395 = smul.addr %s394, 32
        %s396 = scalar_lea.vmem [#allocation7], %s395
        %p397 = pneg %p132
        %p398 = pneg %p129
        %s399 = sand.u32 %s149, 1
        %s400 = scalar_lea.sflag [#allocation9], %s399
        %s401 = sand.u32 %s149, 1
        %s402 = smul.addr %s401, 8
        %s403 = scalar_lea.vmem [#allocation8], %s402
        %p404 = pneg %p162
        %p405 = pneg %p159
        %p406 = pneg %p192
        %p407 = pneg %p189
        %s408 = sand.u32 %s179, 1
        %s409 = scalar_lea.sflag [#allocation4], %s408
        %s410 = sand.u32 %s179, 1
        %s411 = smul.addr %s410, 32
        %s412 = scalar_lea.vmem [#allocation10], %s411
        %p413 = pneg %p222
        %p414 = pneg %p219
        %s415 = sand.u32 %s209, 1
        %s416 = scalar_lea.sflag [#allocation12], %s415
        %s417 = sand.u32 %s209, 1
        %s418 = smul.addr %s417, 32
        %s419 = scalar_lea.vmem [#allocation11], %s418
        %s420 = smul.u32 4, %s38
        %s421 = smul.u32 4, %s38
        %s422 = smul.u32 4, %s38
        %s423 = smul.u32 4, %s38
        %s424 = smul.u32 4, %s38
        %s425 = smul.u32 4, %s38
        %v428 = vld [vmem:[%s346] sm:$0xff]
        %v429 = vld [vmem:[%s346 + $0x8] sm:$0xff]
        %v430 = vld [vmem:[%s346 + $0x10] sm:$0xff]
        %v431 = vld [vmem:[%s346 + $0x18] sm:$0xff]
        %v432 = vld [vmem:[%s355] sm:$0xff]
        %v433 = vld [vmem:[%s355 + $0x8] sm:$0xff]
        %v434 = vld [vmem:[%s355 + $0x10] sm:$0xff]
        %v435 = vld [vmem:[%s355 + $0x18] sm:$0xff]
        %v436 = vld [vmem:[%s364] sm:$0xff]
        %v437 = vld [vmem:[%s364 + $0x8] sm:$0xff]
        %v438 = vld [vmem:[%s364 + $0x10] sm:$0xff]
        %v439 = vld [vmem:[%s364 + $0x18] sm:$0xff]
        %v440 = vld [vmem:[%s373] sm:$0x3]
        %v441 = vld [vmem:[%s373 + $0x2] sm:$0x3]
        %v442 = vld [vmem:[%s373 + $0x4] sm:$0x3]
        %v443 = vld [vmem:[%s373 + $0x6] sm:$0x3]
        %v444 = vmul.f32 %v428, 0.17677669
        %v445 = vmul.f32 %v429, 0.17677669
        %v446 = vmul.f32 %v430, 0.17677669
        %v447 = vmul.f32 %v431, 0.17677669
        %vm448 = vcmask 261120
        %v450 = vsel %vm448, %v444, 0
        %v453 = vsel %vm448, %v432, 0
        %455 = vmatprep.subr.mxu0 0.0
        %456 = vmatpush1.xpose.msra.mxu0 0.0
        %457 = vmatprep.subr.mxu0 0.0
        %458 = vmatpush1.xpose.msra.mxu0 0.0
        %459 = vmatprep.subr.mxu0 0.0
        %460 = vmatpush1.xpose.msra.mxu0 0.0
        %461 = vmatprep.subr.mxu0 0.0
        %462 = vmatpush1.xpose.msra.mxu0 0.0
        %463 = vmatprep.subr.mxu0 0.0
        %464 = vmatpush1.xpose.msra.mxu0 0.0
        %465 = vmatprep.subr.mxu0 0.0
        %466 = vmatpush1.xpose.msra.mxu0 0.0
        %467 = vmatprep.subr.mxu0 0.0
        %468 = vmatpush1.xpose.msra.mxu0 0.0
        %469 = vmatprep.subr.mxu0 0.0
        %470 = vmatpush1.xpose.msra.mxu0 0.0
        %471 = vmatprep.subr.mxu0 0.0
        %472 = vmatpush1.xpose.msra.mxu0 0.0
        %473 = vmatprep.subr.mxu0 0.0
        %474 = vmatpush1.xpose.msra.mxu0 0.0
        %475 = vmatprep.subr.mxu0 0.0
        %476 = vmatpush1.xpose.msra.mxu0 0.0
        %477 = vmatprep.subr.mxu0 0.0
        %478 = vmatpush1.xpose.msra.mxu0 0.0
        %479 = vmatprep.subr.mxu0 0.0
        %480 = vmatpush1.xpose.msra.mxu0 0.0
        %481 = vmatprep.subr.mxu0 0.0
        %482 = vmatpush1.xpose.msra.mxu0 0.0
        %483 = vmatprep.subr.mxu0 0.0
        %484 = vmatpush1.xpose.msra.mxu0 0.0
        %485 = vmatprep.subr.mxu0 0.0
        %486 = vmatpush1.xpose.msra.mxu0 %v453
        %487 = vmatprep.subr.mxu0 0.0
        %488 = vmatpush2.xpose.msra.mxu0 0.0
        %489 = vmatprep.subr.mxu0 0.0
        %490 = vmatpush2.xpose.msra.mxu0 0.0
        %491 = vmatprep.subr.mxu0 0.0
        %492 = vmatpush2.xpose.msra.mxu0 0.0
        %493 = vmatprep.subr.mxu0 0.0
        %494 = vmatpush2.xpose.msra.mxu0 0.0
        %495 = vmatprep.subr.mxu0 0.0
        %496 = vmatpush2.xpose.msra.mxu0 0.0
        %497 = vmatprep.subr.mxu0 0.0
        %498 = vmatpush2.xpose.msra.mxu0 0.0
        %499 = vmatprep.subr.mxu0 0.0
        %500 = vmatpush2.xpose.msra.mxu0 0.0
        %501 = vmatprep.subr.mxu0 0.0
        %502 = vmatpush2.xpose.msra.mxu0 0.0
        %503 = vmatprep.subr.mxu0 0.0
        %504 = vmatpush2.xpose.msra.mxu0 0.0
        %505 = vmatprep.subr.mxu0 0.0
        %506 = vmatpush2.xpose.msra.mxu0 0.0
        %507 = vmatprep.subr.mxu0 0.0
        %508 = vmatpush2.xpose.msra.mxu0 0.0
        %509 = vmatprep.subr.mxu0 0.0
        %510 = vmatpush2.xpose.msra.mxu0 0.0
        %511 = vmatprep.subr.mxu0 0.0
        %512 = vmatpush2.xpose.msra.mxu0 0.0
        %513 = vmatprep.subr.mxu0 0.0
        %514 = vmatpush2.xpose.msra.mxu0 0.0
        %515 = vmatprep.subr.mxu0 0.0
        %516 = vmatpush2.xpose.msra.mxu0 0.0
        %517 = vmatprep.subr.mxu0 0.0
        %518 = vmatpush2.xpose.msra.mxu0 0.0
        %519 = vmatprep.mubr.f32.mxu0 0.0
        %520 = vmatmul.mubr.f32.gmra.mxu0 %v450
        %v521 = vpop.f32.mrf.mxu0
        %v522 = vadd.f32 0.0, %v521
        %v523 = vpop.f32.mrf.mxu0
        %524 = vdwg.mxu0
        %v526 = vsel %vm448, %v445, 0
        %v529 = vsel %vm448, %v433, 0
        %531 = vmatprep.subr.mxu0 0.0
        %532 = vmatpush1.xpose.msra.mxu0 0.0
        %533 = vmatprep.subr.mxu0 0.0
        %534 = vmatpush1.xpose.msra.mxu0 0.0
        %535 = vmatprep.subr.mxu0 0.0
        %536 = vmatpush1.xpose.msra.mxu0 0.0
        %537 = vmatprep.subr.mxu0 0.0
        %538 = vmatpush1.xpose.msra.mxu0 0.0
        %539 = vmatprep.subr.mxu0 0.0
        %540 = vmatpush1.xpose.msra.mxu0 0.0
        %541 = vmatprep.subr.mxu0 0.0
        %542 = vmatpush1.xpose.msra.mxu0 0.0
        %543 = vmatprep.subr.mxu0 0.0
        %544 = vmatpush1.xpose.msra.mxu0 0.0
        %545 = vmatprep.subr.mxu0 0.0
        %546 = vmatpush1.xpose.msra.mxu0 0.0
        %547 = vmatprep.subr.mxu0 0.0
        %548 = vmatpush1.xpose.msra.mxu0 0.0
        %549 = vmatprep.subr.mxu0 0.0
        %550 = vmatpush1.xpose.msra.mxu0 0.0
        %551 = vmatprep.subr.mxu0 0.0
        %552 = vmatpush1.xpose.msra.mxu0 0.0
        %553 = vmatprep.subr.mxu0 0.0
        %554 = vmatpush1.xpose.msra.mxu0 0.0
        %555 = vmatprep.subr.mxu0 0.0
        %556 = vmatpush1.xpose.msra.mxu0 0.0
        %557 = vmatprep.subr.mxu0 0.0
        %558 = vmatpush1.xpose.msra.mxu0 0.0
        %559 = vmatprep.subr.mxu0 0.0
        %560 = vmatpush1.xpose.msra.mxu0 0.0
        %561 = vmatprep.subr.mxu0 0.0
        %562 = vmatpush1.xpose.msra.mxu0 %v529
        %563 = vmatprep.subr.mxu0 0.0
        %564 = vmatpush2.xpose.msra.mxu0 0.0
        %565 = vmatprep.subr.mxu0 0.0
        %566 = vmatpush2.xpose.msra.mxu0 0.0
        %567 = vmatprep.subr.mxu0 0.0
        %568 = vmatpush2.xpose.msra.mxu0 0.0
        %569 = vmatprep.subr.mxu0 0.0
        %570 = vmatpush2.xpose.msra.mxu0 0.0
        %571 = vmatprep.subr.mxu0 0.0
        %572 = vmatpush2.xpose.msra.mxu0 0.0
        %573 = vmatprep.subr.mxu0 0.0
        %574 = vmatpush2.xpose.msra.mxu0 0.0
        %575 = vmatprep.subr.mxu0 0.0
        %576 = vmatpush2.xpose.msra.mxu0 0.0
        %577 = vmatprep.subr.mxu0 0.0
        %578 = vmatpush2.xpose.msra.mxu0 0.0
        %579 = vmatprep.subr.mxu0 0.0
        %580 = vmatpush2.xpose.msra.mxu0 0.0
        %581 = vmatprep.subr.mxu0 0.0
        %582 = vmatpush2.xpose.msra.mxu0 0.0
        %583 = vmatprep.subr.mxu0 0.0
        %584 = vmatpush2.xpose.msra.mxu0 0.0
        %585 = vmatprep.subr.mxu0 0.0
        %586 = vmatpush2.xpose.msra.mxu0 0.0
        %587 = vmatprep.subr.mxu0 0.0
        %588 = vmatpush2.xpose.msra.mxu0 0.0
        %589 = vmatprep.subr.mxu0 0.0
        %590 = vmatpush2.xpose.msra.mxu0 0.0
        %591 = vmatprep.subr.mxu0 0.0
        %592 = vmatpush2.xpose.msra.mxu0 0.0
        %593 = vmatprep.subr.mxu0 0.0
        %594 = vmatpush2.xpose.msra.mxu0 0.0
        %595 = vmatprep.mubr.f32.mxu0 0.0
        %596 = vmatmul.mubr.f32.gmra.mxu0 %v526
        %v597 = vpop.f32.mrf.mxu0
        %v598 = vadd.f32 0.0, %v597
        %v599 = vpop.f32.mrf.mxu0
        %600 = vdwg.mxu0
        %v602 = vsel %vm448, %v446, 0
        %v605 = vsel %vm448, %v434, 0
        %607 = vmatprep.subr.mxu0 0.0
        %608 = vmatpush1.xpose.msra.mxu0 0.0
        %609 = vmatprep.subr.mxu0 0.0
        %610 = vmatpush1.xpose.msra.mxu0 0.0
        %611 = vmatprep.subr.mxu0 0.0
        %612 = vmatpush1.xpose.msra.mxu0 0.0
        %613 = vmatprep.subr.mxu0 0.0
        %614 = vmatpush1.xpose.msra.mxu0 0.0
        %615 = vmatprep.subr.mxu0 0.0
        %616 = vmatpush1.xpose.msra.mxu0 0.0
        %617 = vmatprep.subr.mxu0 0.0
        %618 = vmatpush1.xpose.msra.mxu0 0.0
        %619 = vmatprep.subr.mxu0 0.0
        %620 = vmatpush1.xpose.msra.mxu0 0.0
        %621 = vmatprep.subr.mxu0 0.0
        %622 = vmatpush1.xpose.msra.mxu0 0.0
        %623 = vmatprep.subr.mxu0 0.0
        %624 = vmatpush1.xpose.msra.mxu0 0.0
        %625 = vmatprep.subr.mxu0 0.0
        %626 = vmatpush1.xpose.msra.mxu0 0.0
        %627 = vmatprep.subr.mxu0 0.0
        %628 = vmatpush1.xpose.msra.mxu0 0.0
        %629 = vmatprep.subr.mxu0 0.0
        %630 = vmatpush1.xpose.msra.mxu0 0.0
        %631 = vmatprep.subr.mxu0 0.0
        %632 = vmatpush1.xpose.msra.mxu0 0.0
        %633 = vmatprep.subr.mxu0 0.0
        %634 = vmatpush1.xpose.msra.mxu0 0.0
        %635 = vmatprep.subr.mxu0 0.0
        %636 = vmatpush1.xpose.msra.mxu0 0.0
        %637 = vmatprep.subr.mxu0 0.0
        %638 = vmatpush1.xpose.msra.mxu0 %v605
        %639 = vmatprep.subr.mxu0 0.0
        %640 = vmatpush2.xpose.msra.mxu0 0.0
        %641 = vmatprep.subr.mxu0 0.0
        %642 = vmatpush2.xpose.msra.mxu0 0.0
        %643 = vmatprep.subr.mxu0 0.0
        %644 = vmatpush2.xpose.msra.mxu0 0.0
        %645 = vmatprep.subr.mxu0 0.0
        %646 = vmatpush2.xpose.msra.mxu0 0.0
        %647 = vmatprep.subr.mxu0 0.0
        %648 = vmatpush2.xpose.msra.mxu0 0.0
        %649 = vmatprep.subr.mxu0 0.0
        %650 = vmatpush2.xpose.msra.mxu0 0.0
        %651 = vmatprep.subr.mxu0 0.0
        %652 = vmatpush2.xpose.msra.mxu0 0.0
        %653 = vmatprep.subr.mxu0 0.0
        %654 = vmatpush2.xpose.msra.mxu0 0.0
        %655 = vmatprep.subr.mxu0 0.0
        %656 = vmatpush2.xpose.msra.mxu0 0.0
        %657 = vmatprep.subr.mxu0 0.0
        %658 = vmatpush2.xpose.msra.mxu0 0.0
        %659 = vmatprep.subr.mxu0 0.0
        %660 = vmatpush2.xpose.msra.mxu0 0.0
        %661 = vmatprep.subr.mxu0 0.0
        %662 = vmatpush2.xpose.msra.mxu0 0.0
        %663 = vmatprep.subr.mxu0 0.0
        %664 = vmatpush2.xpose.msra.mxu0 0.0
        %665 = vmatprep.subr.mxu0 0.0
        %666 = vmatpush2.xpose.msra.mxu0 0.0
        %667 = vmatprep.subr.mxu0 0.0
        %668 = vmatpush2.xpose.msra.mxu0 0.0
        %669 = vmatprep.subr.mxu0 0.0
        %670 = vmatpush2.xpose.msra.mxu0 0.0
        %671 = vmatprep.mubr.f32.mxu0 0.0
        %672 = vmatmul.mubr.f32.gmra.mxu0 %v602
        %v673 = vpop.f32.mrf.mxu0
        %v674 = vadd.f32 0.0, %v673
        %v675 = vpop.f32.mrf.mxu0
        %676 = vdwg.mxu0
        %v678 = vsel %vm448, %v447, 0
        %v681 = vsel %vm448, %v435, 0
        %683 = vmatprep.subr.mxu0 0.0
        %684 = vmatpush1.xpose.msra.mxu0 0.0
        %685 = vmatprep.subr.mxu0 0.0
        %686 = vmatpush1.xpose.msra.mxu0 0.0
        %687 = vmatprep.subr.mxu0 0.0
        %688 = vmatpush1.xpose.msra.mxu0 0.0
        %689 = vmatprep.subr.mxu0 0.0
        %690 = vmatpush1.xpose.msra.mxu0 0.0
        %691 = vmatprep.subr.mxu0 0.0
        %692 = vmatpush1.xpose.msra.mxu0 0.0
        %693 = vmatprep.subr.mxu0 0.0
        %694 = vmatpush1.xpose.msra.mxu0 0.0
        %695 = vmatprep.subr.mxu0 0.0
        %696 = vmatpush1.xpose.msra.mxu0 0.0
        %697 = vmatprep.subr.mxu0 0.0
        %698 = vmatpush1.xpose.msra.mxu0 0.0
        %699 = vmatprep.subr.mxu0 0.0
        %700 = vmatpush1.xpose.msra.mxu0 0.0
        %701 = vmatprep.subr.mxu0 0.0
        %702 = vmatpush1.xpose.msra.mxu0 0.0
        %703 = vmatprep.subr.mxu0 0.0
        %704 = vmatpush1.xpose.msra.mxu0 0.0
        %705 = vmatprep.subr.mxu0 0.0
        %706 = vmatpush1.xpose.msra.mxu0 0.0
        %707 = vmatprep.subr.mxu0 0.0
        %708 = vmatpush1.xpose.msra.mxu0 0.0
        %709 = vmatprep.subr.mxu0 0.0
        %710 = vmatpush1.xpose.msra.mxu0 0.0
        %711 = vmatprep.subr.mxu0 0.0
        %712 = vmatpush1.xpose.msra.mxu0 0.0
        %713 = vmatprep.subr.mxu0 0.0
        %714 = vmatpush1.xpose.msra.mxu0 %v681
        %715 = vmatprep.subr.mxu0 0.0
        %716 = vmatpush2.xpose.msra.mxu0 0.0
        %717 = vmatprep.subr.mxu0 0.0
        %718 = vmatpush2.xpose.msra.mxu0 0.0
        %719 = vmatprep.subr.mxu0 0.0
        %720 = vmatpush2.xpose.msra.mxu0 0.0
        %721 = vmatprep.subr.mxu0 0.0
        %722 = vmatpush2.xpose.msra.mxu0 0.0
        %723 = vmatprep.subr.mxu0 0.0
        %724 = vmatpush2.xpose.msra.mxu0 0.0
        %725 = vmatprep.subr.mxu0 0.0
        %726 = vmatpush2.xpose.msra.mxu0 0.0
        %727 = vmatprep.subr.mxu0 0.0
        %728 = vmatpush2.xpose.msra.mxu0 0.0
        %729 = vmatprep.subr.mxu0 0.0
        %730 = vmatpush2.xpose.msra.mxu0 0.0
        %731 = vmatprep.subr.mxu0 0.0
        %732 = vmatpush2.xpose.msra.mxu0 0.0
        %733 = vmatprep.subr.mxu0 0.0
        %734 = vmatpush2.xpose.msra.mxu0 0.0
        %735 = vmatprep.subr.mxu0 0.0
        %736 = vmatpush2.xpose.msra.mxu0 0.0
        %737 = vmatprep.subr.mxu0 0.0
        %738 = vmatpush2.xpose.msra.mxu0 0.0
        %739 = vmatprep.subr.mxu0 0.0
        %740 = vmatpush2.xpose.msra.mxu0 0.0
        %741 = vmatprep.subr.mxu0 0.0
        %742 = vmatpush2.xpose.msra.mxu0 0.0
        %743 = vmatprep.subr.mxu0 0.0
        %744 = vmatpush2.xpose.msra.mxu0 0.0
        %745 = vmatprep.subr.mxu0 0.0
        %746 = vmatpush2.xpose.msra.mxu0 0.0
        %747 = vmatprep.mubr.f32.mxu0 0.0
        %748 = vmatmul.mubr.f32.gmra.mxu0 %v678
        %v749 = vpop.f32.mrf.mxu0
        %v750 = vadd.f32 0.0, %v749
        %v751 = vpop.f32.mrf.mxu0
        %752 = vdwg.mxu0
        %vm753 = vnez %v440
        %vm754 = vnez %v441
        %vm755 = vnez %v442
        %vm756 = vnez %v443
        %v757 = vsel %vm753, 16843009, 0
        %v758 = vsel %vm754, 16843009, 0
        %v759 = vsel %vm755, 16843009, 0
        %v760 = vsel %vm756, 16843009, 0
        %v761 = vunpack.c.0.s8 %v757
        %v762 = vunpack.c.0.s8 %v758
        %v763 = vunpack.c.0.s8 %v759
        %v764 = vunpack.c.0.s8 %v760
        %vm765 = vcmp.ne.s32.totalorder %v761, 0
        %vm766 = vcmp.ne.s32.totalorder %v762, 0
        %vm767 = vcmp.ne.s32.totalorder %v763, 0
        %vm768 = vcmp.ne.s32.totalorder %v764, 0
        %v769 = vsel %vm765, -1e+09, %v522
        %v770 = vsel %vm766, -1e+09, %v598
        %v771 = vsel %vm767, -1e+09, %v674
        %v772 = vsel %vm768, -1e+09, %v750
        %vm773 = vcmask 64512
        %v774 = vsel %vm773, %v769, -inf
        %775 = vmax.xlane.f32.xlu0 %v774
        %v776 = vpop.xlane.xlu0 %775
        %v777 = vsel %vm773, %v770, -inf
        %778 = vmax.xlane.f32.xlu0 %v777
        %v779 = vpop.xlane.xlu0 %778
        %v780 = vsel %vm773, %v771, -inf
        %781 = vmax.xlane.f32.xlu0 %v780
        %v782 = vpop.xlane.xlu0 %781
        %v783 = vsel %vm773, %v772, -inf
        %784 = vmax.xlane.f32.xlu0 %v783
        %v785 = vpop.xlane.xlu0 %784
        %v786 = vsub.f32 %v769, %v776
        %v787 = vsub.f32 %v770, %v779
        %v788 = vsub.f32 %v771, %v782
        %v789 = vsub.f32 %v772, %v785
        %v790 = vmul.f32 %v786, 1.442695
        %v791 = vpow.pop %v790
        %v792 = vmul.f32 %v787, 1.442695
        %v793 = vpow.pop %v792
        %v794 = vmul.f32 %v788, 1.442695
        %v795 = vpow.pop %v794
        %v796 = vmul.f32 %v789, 1.442695
        %v797 = vpow.pop %v796
        %v798 = vsel %vm773, %v791, 0.0
        %799 = vadd.xlane.f32.xlu0 %v798
        %v800 = vpop.xlane.xlu0 %799
        %v801 = vsel %vm773, %v793, 0.0
        %802 = vadd.xlane.f32.xlu0 %v801
        %v803 = vpop.xlane.xlu0 %802
        %v804 = vsel %vm773, %v795, 0.0
        %805 = vadd.xlane.f32.xlu0 %v804
        %v806 = vpop.xlane.xlu0 %805
        %v807 = vsel %vm773, %v797, 0.0
        %808 = vadd.xlane.f32.xlu0 %v807
        %v809 = vpop.xlane.xlu0 %808
        %v810 = vrcp.pop %v800
        %v811 = vmul.f32 %v791, %v810
        %v812 = vrcp.pop %v803
        %v813 = vmul.f32 %v793, %v812
        %v814 = vrcp.pop %v806
        %v815 = vmul.f32 %v795, %v814
        %v816 = vrcp.pop %v809
        %v817 = vmul.f32 %v797, %v816
        %v819 = vsel %vm773, %v811, 0
        %821 = vmatprep.subr.mxu0 0.0
        %822 = vmatpush1.msra.mxu0 0.0
        %823 = vmatprep.subr.mxu0 0.0
        %824 = vmatpush1.msra.mxu0 0.0
        %825 = vmatprep.subr.mxu0 0.0
        %826 = vmatpush1.msra.mxu0 0.0
        %827 = vmatprep.subr.mxu0 0.0
        %828 = vmatpush1.msra.mxu0 0.0
        %829 = vmatprep.subr.mxu0 0.0
        %830 = vmatpush1.msra.mxu0 0.0
        %831 = vmatprep.subr.mxu0 0.0
        %832 = vmatpush1.msra.mxu0 0.0
        %833 = vmatprep.subr.mxu0 0.0
        %834 = vmatpush1.msra.mxu0 0.0
        %835 = vmatprep.subr.mxu0 0.0
        %836 = vmatpush1.msra.mxu0 0.0
        %837 = vmatprep.subr.mxu0 0.0
        %838 = vmatpush1.msra.mxu0 0.0
        %839 = vmatprep.subr.mxu0 0.0
        %840 = vmatpush1.msra.mxu0 0.0
        %841 = vmatprep.subr.mxu0 0.0
        %842 = vmatpush1.msra.mxu0 0.0
        %843 = vmatprep.subr.mxu0 0.0
        %844 = vmatpush1.msra.mxu0 0.0
        %845 = vmatprep.subr.mxu0 0.0
        %846 = vmatpush1.msra.mxu0 0.0
        %847 = vmatprep.subr.mxu0 0.0
        %848 = vmatpush1.msra.mxu0 0.0
        %849 = vmatprep.subr.mxu0 0.0
        %850 = vmatpush1.msra.mxu0 0.0
        %851 = vmatprep.subr.mxu0 0.0
        %852 = vmatpush1.msra.mxu0 %v436
        %853 = vmatprep.subr.mxu0 0.0
        %854 = vmatpush2.msra.mxu0 0.0
        %855 = vmatprep.subr.mxu0 0.0
        %856 = vmatpush2.msra.mxu0 0.0
        %857 = vmatprep.subr.mxu0 0.0
        %858 = vmatpush2.msra.mxu0 0.0
        %859 = vmatprep.subr.mxu0 0.0
        %860 = vmatpush2.msra.mxu0 0.0
        %861 = vmatprep.subr.mxu0 0.0
        %862 = vmatpush2.msra.mxu0 0.0
        %863 = vmatprep.subr.mxu0 0.0
        %864 = vmatpush2.msra.mxu0 0.0
        %865 = vmatprep.subr.mxu0 0.0
        %866 = vmatpush2.msra.mxu0 0.0
        %867 = vmatprep.subr.mxu0 0.0
        %868 = vmatpush2.msra.mxu0 0.0
        %869 = vmatprep.subr.mxu0 0.0
        %870 = vmatpush2.msra.mxu0 0.0
        %871 = vmatprep.subr.mxu0 0.0
        %872 = vmatpush2.msra.mxu0 0.0
        %873 = vmatprep.subr.mxu0 0.0
        %874 = vmatpush2.msra.mxu0 0.0
        %875 = vmatprep.subr.mxu0 0.0
        %876 = vmatpush2.msra.mxu0 0.0
        %877 = vmatprep.subr.mxu0 0.0
        %878 = vmatpush2.msra.mxu0 0.0
        %879 = vmatprep.subr.mxu0 0.0
        %880 = vmatpush2.msra.mxu0 0.0
        %881 = vmatprep.subr.mxu0 0.0
        %882 = vmatpush2.msra.mxu0 0.0
        %883 = vmatprep.subr.mxu0 0.0
        %884 = vmatpush2.msra.mxu0 0.0
        %885 = vmatprep.mubr.f32.mxu0 0.0
        %886 = vmatmul.mubr.f32.gmra.mxu0 %v819
        %v887 = vpop.f32.mrf.mxu0
        %v888 = vadd.f32 0.0, %v887
        %v889 = vpop.f32.mrf.mxu0
        %890 = vdwg.mxu0
        %v892 = vsel %vm773, %v813, 0
        %894 = vmatprep.subr.mxu0 0.0
        %895 = vmatpush1.msra.mxu0 0.0
        %896 = vmatprep.subr.mxu0 0.0
        %897 = vmatpush1.msra.mxu0 0.0
        %898 = vmatprep.subr.mxu0 0.0
        %899 = vmatpush1.msra.mxu0 0.0
        %900 = vmatprep.subr.mxu0 0.0
        %901 = vmatpush1.msra.mxu0 0.0
        %902 = vmatprep.subr.mxu0 0.0
        %903 = vmatpush1.msra.mxu0 0.0
        %904 = vmatprep.subr.mxu0 0.0
        %905 = vmatpush1.msra.mxu0 0.0
        %906 = vmatprep.subr.mxu0 0.0
        %907 = vmatpush1.msra.mxu0 0.0
        %908 = vmatprep.subr.mxu0 0.0
        %909 = vmatpush1.msra.mxu0 0.0
        %910 = vmatprep.subr.mxu0 0.0
        %911 = vmatpush1.msra.mxu0 0.0
        %912 = vmatprep.subr.mxu0 0.0
        %913 = vmatpush1.msra.mxu0 0.0
        %914 = vmatprep.subr.mxu0 0.0
        %915 = vmatpush1.msra.mxu0 0.0
        %916 = vmatprep.subr.mxu0 0.0
        %917 = vmatpush1.msra.mxu0 0.0
        %918 = vmatprep.subr.mxu0 0.0
        %919 = vmatpush1.msra.mxu0 0.0
        %920 = vmatprep.subr.mxu0 0.0
        %921 = vmatpush1.msra.mxu0 0.0
        %922 = vmatprep.subr.mxu0 0.0
        %923 = vmatpush1.msra.mxu0 0.0
        %924 = vmatprep.subr.mxu0 0.0
        %925 = vmatpush1.msra.mxu0 %v437
        %926 = vmatprep.subr.mxu0 0.0
        %927 = vmatpush2.msra.mxu0 0.0
        %928 = vmatprep.subr.mxu0 0.0
        %929 = vmatpush2.msra.mxu0 0.0
        %930 = vmatprep.subr.mxu0 0.0
        %931 = vmatpush2.msra.mxu0 0.0
        %932 = vmatprep.subr.mxu0 0.0
        %933 = vmatpush2.msra.mxu0 0.0
        %934 = vmatprep.subr.mxu0 0.0
        %935 = vmatpush2.msra.mxu0 0.0
        %936 = vmatprep.subr.mxu0 0.0
        %937 = vmatpush2.msra.mxu0 0.0
        %938 = vmatprep.subr.mxu0 0.0
        %939 = vmatpush2.msra.mxu0 0.0
        %940 = vmatprep.subr.mxu0 0.0
        %941 = vmatpush2.msra.mxu0 0.0
        %942 = vmatprep.subr.mxu0 0.0
        %943 = vmatpush2.msra.mxu0 0.0
        %944 = vmatprep.subr.mxu0 0.0
        %945 = vmatpush2.msra.mxu0 0.0
        %946 = vmatprep.subr.mxu0 0.0
        %947 = vmatpush2.msra.mxu0 0.0
        %948 = vmatprep.subr.mxu0 0.0
        %949 = vmatpush2.msra.mxu0 0.0
        %950 = vmatprep.subr.mxu0 0.0
        %951 = vmatpush2.msra.mxu0 0.0
        %952 = vmatprep.subr.mxu0 0.0
        %953 = vmatpush2.msra.mxu0 0.0
        %954 = vmatprep.subr.mxu0 0.0
        %955 = vmatpush2.msra.mxu0 0.0
        %956 = vmatprep.subr.mxu0 0.0
        %957 = vmatpush2.msra.mxu0 0.0
        %958 = vmatprep.mubr.f32.mxu0 0.0
        %959 = vmatmul.mubr.f32.gmra.mxu0 %v892
        %v960 = vpop.f32.mrf.mxu0
        %v961 = vadd.f32 0.0, %v960
        %v962 = vpop.f32.mrf.mxu0
        %963 = vdwg.mxu0
        %v965 = vsel %vm773, %v815, 0
        %967 = vmatprep.subr.mxu0 0.0
        %968 = vmatpush1.msra.mxu0 0.0
        %969 = vmatprep.subr.mxu0 0.0
        %970 = vmatpush1.msra.mxu0 0.0
        %971 = vmatprep.subr.mxu0 0.0
        %972 = vmatpush1.msra.mxu0 0.0
        %973 = vmatprep.subr.mxu0 0.0
        %974 = vmatpush1.msra.mxu0 0.0
        %975 = vmatprep.subr.mxu0 0.0
        %976 = vmatpush1.msra.mxu0 0.0
        %977 = vmatprep.subr.mxu0 0.0
        %978 = vmatpush1.msra.mxu0 0.0
        %979 = vmatprep.subr.mxu0 0.0
        %980 = vmatpush1.msra.mxu0 0.0
        %981 = vmatprep.subr.mxu0 0.0
        %982 = vmatpush1.msra.mxu0 0.0
        %983 = vmatprep.subr.mxu0 0.0
        %984 = vmatpush1.msra.mxu0 0.0
        %985 = vmatprep.subr.mxu0 0.0
        %986 = vmatpush1.msra.mxu0 0.0
        %987 = vmatprep.subr.mxu0 0.0
        %988 = vmatpush1.msra.mxu0 0.0
        %989 = vmatprep.subr.mxu0 0.0
        %990 = vmatpush1.msra.mxu0 0.0
        %991 = vmatprep.subr.mxu0 0.0
        %992 = vmatpush1.msra.mxu0 0.0
        %993 = vmatprep.subr.mxu0 0.0
        %994 = vmatpush1.msra.mxu0 0.0
        %995 = vmatprep.subr.mxu0 0.0
        %996 = vmatpush1.msra.mxu0 0.0
        %997 = vmatprep.subr.mxu0 0.0
        %998 = vmatpush1.msra.mxu0 %v438
        %999 = vmatprep.subr.mxu0 0.0
        %1000 = vmatpush2.msra.mxu0 0.0
        %1001 = vmatprep.subr.mxu0 0.0
        %1002 = vmatpush2.msra.mxu0 0.0
        %1003 = vmatprep.subr.mxu0 0.0
        %1004 = vmatpush2.msra.mxu0 0.0
        %1005 = vmatprep.subr.mxu0 0.0
        %1006 = vmatpush2.msra.mxu0 0.0
        %1007 = vmatprep.subr.mxu0 0.0
        %1008 = vmatpush2.msra.mxu0 0.0
        %1009 = vmatprep.subr.mxu0 0.0
        %1010 = vmatpush2.msra.mxu0 0.0
        %1011 = vmatprep.subr.mxu0 0.0
        %1012 = vmatpush2.msra.mxu0 0.0
        %1013 = vmatprep.subr.mxu0 0.0
        %1014 = vmatpush2.msra.mxu0 0.0
        %1015 = vmatprep.subr.mxu0 0.0
        %1016 = vmatpush2.msra.mxu0 0.0
        %1017 = vmatprep.subr.mxu0 0.0
        %1018 = vmatpush2.msra.mxu0 0.0
        %1019 = vmatprep.subr.mxu0 0.0
        %1020 = vmatpush2.msra.mxu0 0.0
        %1021 = vmatprep.subr.mxu0 0.0
        %1022 = vmatpush2.msra.mxu0 0.0
        %1023 = vmatprep.subr.mxu0 0.0
        %1024 = vmatpush2.msra.mxu0 0.0
        %1025 = vmatprep.subr.mxu0 0.0
        %1026 = vmatpush2.msra.mxu0 0.0
        %1027 = vmatprep.subr.mxu0 0.0
        %1028 = vmatpush2.msra.mxu0 0.0
        %1029 = vmatprep.subr.mxu0 0.0
        %1030 = vmatpush2.msra.mxu0 0.0
        %1031 = vmatprep.mubr.f32.mxu0 0.0
        %1032 = vmatmul.mubr.f32.gmra.mxu0 %v965
        %v1033 = vpop.f32.mrf.mxu0
        %v1034 = vadd.f32 0.0, %v1033
        %v1035 = vpop.f32.mrf.mxu0
        %1036 = vdwg.mxu0
        %v1038 = vsel %vm773, %v817, 0
        %1040 = vmatprep.subr.mxu0 0.0
        %1041 = vmatpush1.msra.mxu0 0.0
        %1042 = vmatprep.subr.mxu0 0.0
        %1043 = vmatpush1.msra.mxu0 0.0
        %1044 = vmatprep.subr.mxu0 0.0
        %1045 = vmatpush1.msra.mxu0 0.0
        %1046 = vmatprep.subr.mxu0 0.0
        %1047 = vmatpush1.msra.mxu0 0.0
        %1048 = vmatprep.subr.mxu0 0.0
        %1049 = vmatpush1.msra.mxu0 0.0
        %1050 = vmatprep.subr.mxu0 0.0
        %1051 = vmatpush1.msra.mxu0 0.0
        %1052 = vmatprep.subr.mxu0 0.0
        %1053 = vmatpush1.msra.mxu0 0.0
        %1054 = vmatprep.subr.mxu0 0.0
        %1055 = vmatpush1.msra.mxu0 0.0
        %1056 = vmatprep.subr.mxu0 0.0
        %1057 = vmatpush1.msra.mxu0 0.0
        %1058 = vmatprep.subr.mxu0 0.0
        %1059 = vmatpush1.msra.mxu0 0.0
        %1060 = vmatprep.subr.mxu0 0.0
        %1061 = vmatpush1.msra.mxu0 0.0
        %1062 = vmatprep.subr.mxu0 0.0
        %1063 = vmatpush1.msra.mxu0 0.0
        %1064 = vmatprep.subr.mxu0 0.0
        %1065 = vmatpush1.msra.mxu0 0.0
        %1066 = vmatprep.subr.mxu0 0.0
        %1067 = vmatpush1.msra.mxu0 0.0
        %1068 = vmatprep.subr.mxu0 0.0
        %1069 = vmatpush1.msra.mxu0 0.0
        %1070 = vmatprep.subr.mxu0 0.0
        %1071 = vmatpush1.msra.mxu0 %v439
        %1072 = vmatprep.subr.mxu0 0.0
        %1073 = vmatpush2.msra.mxu0 0.0
        %1074 = vmatprep.subr.mxu0 0.0
        %1075 = vmatpush2.msra.mxu0 0.0
        %1076 = vmatprep.subr.mxu0 0.0
        %1077 = vmatpush2.msra.mxu0 0.0
        %1078 = vmatprep.subr.mxu0 0.0
        %1079 = vmatpush2.msra.mxu0 0.0
        %1080 = vmatprep.subr.mxu0 0.0
        %1081 = vmatpush2.msra.mxu0 0.0
        %1082 = vmatprep.subr.mxu0 0.0
        %1083 = vmatpush2.msra.mxu0 0.0
        %1084 = vmatprep.subr.mxu0 0.0
        %1085 = vmatpush2.msra.mxu0 0.0
        %1086 = vmatprep.subr.mxu0 0.0
        %1087 = vmatpush2.msra.mxu0 0.0
        %1088 = vmatprep.subr.mxu0 0.0
        %1089 = vmatpush2.msra.mxu0 0.0
        %1090 = vmatprep.subr.mxu0 0.0
        %1091 = vmatpush2.msra.mxu0 0.0
        %1092 = vmatprep.subr.mxu0 0.0
        %1093 = vmatpush2.msra.mxu0 0.0
        %1094 = vmatprep.subr.mxu0 0.0
        %1095 = vmatpush2.msra.mxu0 0.0
        %1096 = vmatprep.subr.mxu0 0.0
        %1097 = vmatpush2.msra.mxu0 0.0
        %1098 = vmatprep.subr.mxu0 0.0
        %1099 = vmatpush2.msra.mxu0 0.0
        %1100 = vmatprep.subr.mxu0 0.0
        %1101 = vmatpush2.msra.mxu0 0.0
        %1102 = vmatprep.subr.mxu0 0.0
        %1103 = vmatpush2.msra.mxu0 0.0
        %1104 = vmatprep.mubr.f32.mxu0 0.0
        %1105 = vmatmul.mubr.f32.gmra.mxu0 %v1038
        %v1106 = vpop.f32.mrf.mxu0
        %v1107 = vadd.f32 0.0, %v1106
        %v1108 = vpop.f32.mrf.mxu0
        %1109 = vdwg.mxu0
        %1110 = vst.msk [vmem:[%s412] sm:$0xff] %vm448, %v888
        %1111 = vst.msk [vmem:[%s412 + $0x8] sm:$0xff] %vm448, %v961
        %1112 = vst.msk [vmem:[%s412 + $0x10] sm:$0xff] %vm448, %v1034
        %1113 = vst.msk [vmem:[%s412 + $0x18] sm:$0xff] %vm448, %v1107
        %1114 = vst.msk [vmem:[%s419] sm:$0xff] %vm773, %v811
        %1115 = vst.msk [vmem:[%s419 + $0x8] sm:$0xff] %vm773, %v813
        %1116 = vst.msk [vmem:[%s419 + $0x10] sm:$0xff] %vm773, %v815
        %1117 = vst.msk [vmem:[%s419 + $0x18] sm:$0xff] %vm773, %v817
        %s1118 = sand.u32 %s179, 1
        %s1119 = scalar_lea.sflag [#allocation4], %s1118
        %s1120 = sand.u32 %s179, 1
        %s1121 = smul.addr %s1120, 32
        %s1122 = scalar_lea.vmem [#allocation10], %s1121
        %s1123 = sand.u32 %s209, 1
        %s1124 = scalar_lea.sflag [#allocation12], %s1123
        %s1125 = sand.u32 %s209, 1
        %s1126 = smul.addr %s1125, 32
        %s1127 = scalar_lea.vmem [#allocation11], %s1126
        // Predicated region
        $region53: #{tpu_custom_call.1} parent=35 // pred_check
          %p1128 = pneg %p189
        $region54: #{tpu_custom_call.1} parent=35 // pred_check_branch
          %1130 = sbr.rel (%p1128) target = $region56
        $region55: #{tpu_custom_call.1} parent=35 // pred_region
          %s1131 = smul.u32 4, %s38
          %s1133 = ssub.s32 512, 512
          %1134 = vsyncadd %s1119, %s1133
          %s1135 = sadd.s32 %s39, %s1131
          %s1136 = smul.addr %s37, 4
          %s1137 = sadd.s32 %s1135, %s1136
          %s1138 = smul.addr %s1137, 128
          %s1139 = scalar_lea.hbm %s4, %s1138
          %s1140 = sshll.u32 %s1122, 4
          %s1141 = int_to_ptr.vmem [resolvable:$true] %s1140
          %1146 = dma.vmem_to_hbm [thread:$0]  %s1141, 512, %s1139, %s1119, 128, 128, 8
        $region56: #{tpu_custom_call.1} parent=35 // pred_fallthru
          _
        // Predicated region
        $region57: #{tpu_custom_call.1} parent=35 // pred_check
          %p1147 = pneg %p219
        $region58: #{tpu_custom_call.1} parent=35 // pred_check_branch
          %1149 = sbr.rel (%p1147) target = $region60
        $region59: #{tpu_custom_call.1} parent=35 // pred_region
          %s1150 = smul.u32 4, %s38
          %s1152 = ssub.s32 512, 512
          %1153 = vsyncadd %s1124, %s1152
          %s1154 = sadd.s32 %s39, %s1150
          %s1155 = smul.addr %s37, 4
          %s1156 = sadd.s32 %s1154, %s1155
          %s1157 = smul.addr %s1156, 128
          %s1158 = scalar_lea.hbm %s5, %s1157
          %s1159 = sshll.u32 %s1127, 4
          %s1160 = int_to_ptr.vmem [resolvable:$true] %s1159
          %1165 = dma.vmem_to_hbm [thread:$0]  %s1160, 512, %s1158, %s1124, 128, 128, 8
        $region60: #{tpu_custom_call.1} parent=35 // pred_fallthru
          _
      $region36: #{tpu_custom_call.1} parent=5 // pred_fallthru
        _
      %p1166 = scmp.le.s32.totalorder 2, %s27
      // Predicated region
      $region61: #{tpu_custom_call.1} parent=5 // pred_check
        %p1167 = pneg %p1166
      $region62: #{tpu_custom_call.1} parent=5 // pred_check_branch
        %1169 = sbr.rel (%p1167) target = $region64
      $region63: #{tpu_custom_call.1} parent=5 // pred_region
        %s1170 = ssub.s32 %s27, 2
        // Predicated region
        $region65: #{tpu_custom_call.1} parent=63 // pred_check
          %p1171 = pneg %p195
        $region66: #{tpu_custom_call.1} parent=63 // pred_check_branch
          %1173 = sbr.rel (%p1171) target = $region68
        $region67: #{tpu_custom_call.1} parent=63 // pred_region
          %s1174 = sand.u32 %s180, 1
          %s1175 = scalar_lea.sflag [#allocation4], %s1174
          %s1176 = sand.u32 %s180, 1
          %s1177 = smul.addr %s1176, 32
          %s1178 = scalar_lea.vmem [#allocation10], %s1177
          %1179 = dma.done %s1175, 512
        $region68: #{tpu_custom_call.1} parent=63 // pred_fallthru
          _
        // Predicated region
        $region69: #{tpu_custom_call.1} parent=63 // pred_check
          %p1180 = pneg %p225
        $region70: #{tpu_custom_call.1} parent=63 // pred_check_branch
          %1182 = sbr.rel (%p1180) target = $region72
        $region71: #{tpu_custom_call.1} parent=63 // pred_region
          %s1183 = sand.u32 %s210, 1
          %s1184 = scalar_lea.sflag [#allocation12], %s1183
          %s1185 = sand.u32 %s210, 1
          %s1186 = smul.addr %s1185, 32
          %s1187 = scalar_lea.vmem [#allocation11], %s1186
          %1188 = dma.done %s1184, 512
        $region72: #{tpu_custom_call.1} parent=63 // pred_fallthru
          _
      $region64: #{tpu_custom_call.1} parent=5 // pred_fallthru
        _
    $region6: #{tpu_custom_call.1} parent=1 // loop_footer
      %s31 = sadd.s32 1, %s27
    $region7: #{tpu_custom_call.1} parent=1 // loop_footer_branch
      %26 = sbr.rel target = $region3
    $region8: #{tpu_custom_call.1} parent=1 // loop_exit
      _
    %1189 = vsyncpa [#allocation3], 1
    %s1190 = scalar_lea.sflag [#allocation3], 1
    %1191 = vsyncpa %s1190, 1
    %1192 = vsyncpa [#allocation6], 1
    %s1193 = scalar_lea.sflag [#allocation6], 1
    %1194 = vsyncpa %s1193, 1
    %1195 = vsyncpa [#allocation9], 1
    %s1196 = scalar_lea.sflag [#allocation9], 1
    %1197 = vsyncpa %s1196, 1
    %1198 = vsyncpa [#allocation4], 1
    %s1199 = scalar_lea.sflag [#allocation4], 1
    %1200 = vsyncpa %s1199, 1
    %1201 = vsyncpa [#allocation12], 1
    %s1202 = scalar_lea.sflag [#allocation12], 1
    %1203 = vsyncpa %s1202, 1

</llo_original>
